<compile_context>
chip_gen: v5e
topology: v5e:2x2
jax: 0.10.0
libtpu: 0.0.40
codegen_flags: <defaults>
</compile_context>

<pallas_src>
import jax
import jax.numpy as jnp
from jax.experimental import pallas as pl
from jax.experimental.pallas import tpu as pltpu

LANE = 128
_VMEM_SMALL = 32 * 1024 * 1024          # linear / discriminator kernels
_XW_RESIDENT_BYTES = 16 * 1024 * 1024   # keep XW fully VMEM-resident below this


def _round_up(x, m):
    return ((x + m - 1) // m) * m


def _pad_to(a, shape):
    pads = [(0, s - d) for d, s in zip(a.shape, shape)]
    if all(p == (0, 0) for p in pads):
        return a
    return jnp.pad(a, pads)


def _prop_tiling(n):
    """(n_pad, tm, tk) for the A_hat @ XW contraction."""
    if n <= 512:
        return n, n, n                     # single block == full array dims
    n_pad = _round_up(n, 256)
    tk = 512 if n_pad % 512 == 0 else 256
    tm = 256
    for cand in (1024, 512):               # biggest row tile that still keeps
        if n_pad % cand == 0 and n_pad // cand >= 2:   # >=2 row blocks (v7x, 2 TCs)
            tm = cand
            break
    return n_pad, tm, tk


def _linear_tiling(m):
    if m <= 512:
        return m, m
    return _round_up(m, 256), 256


# ---------------------------------------------------------------------------
# Pallas kernels
# ---------------------------------------------------------------------------

def _linear_kernel(x_ref, w_ref, o_ref):
    # (tm, K) @ (K, D) -> bf16 output, f32 accumulation on the MXU.
    o_ref[...] = jnp.dot(x_ref[...], w_ref[...],
                         preferred_element_type=jnp.float32).astype(o_ref.dtype)


def _make_prop_kernel(xw_resident, tk):
    """One (row-block, reduction-block) step of H = PReLU(A_hat @ XW + b).

    Also emits per-row-block column sums of H (f32, computed from the f32
    pre-cast values) so the readout mean never has to re-read H from HBM.
    """
    def kernel(a_ref, xw_ref, b_ref, p_ref, o_ref, cs_ref, acc_ref):
        k = pl.program_id(1)

        @pl.when(k == 0)
        def _():
            acc_ref[...] = jnp.zeros_like(acc_ref)

        if xw_resident:
            start = pl.multiple_of(k * tk, tk)
            xw_blk = xw_ref[pl.ds(start, tk), :]
        else:
            xw_blk = xw_ref[...]
        acc_ref[...] += jnp.dot(a_ref[...], xw_blk,
                                preferred_element_type=jnp.float32)

        @pl.when(k == pl.num_programs(1) - 1)
        def _():
            h = acc_ref[...] + b_ref[...]
            slope = p_ref[0]                        # SMEM scalar PReLU slope
            hp = jnp.where(h > 0, h, h * slope)
            o_ref[...] = hp.astype(o_ref.dtype)     # bf16 writeback
            s = jnp.sum(hp, axis=0, keepdims=True)  # (1, dcols) f32 column sum
            cs_ref[...] = jnp.broadcast_to(s[None], (1, 8, s.shape[-1]))

    return kernel


def _disc_kernel(ha_ref, hb_ref, v_ref, b_ref, o_ref):
    # ha_ref/hb_ref: (tn, 2*d) fused [clean | corrupted] node embeddings (bf16)
    # v_ref:         (2, d)   rows [hb@W, ha@W]                          (bf16)
    # b_ref:         (1,)     bilinear bias (SMEM scalar)
    # o_ref:         (4, tn)  lane-dense scores
    dp = v_ref.shape[1]
    v0 = v_ref[0:1, :]                      # hb @ W  (pairs with view-a nodes)
    v1 = v_ref[1:2, :]                      # ha @ W  (pairs with view-b nodes)

    def mv(v, h):                           # (1,D) x (tn,D) -> (1, tn)
        return jax.lax.dot_general(
            v, h, dimension_numbers=(((1,), (1,)), ((), ())),
            preferred_element_type=jnp.float32)

    s = jnp.concatenate([mv(v0, ha_ref[:, :dp]),     # bilinear(hb, Ha)
                         mv(v1, hb_ref[:, :dp]),     # bilinear(ha, Hb)
                         mv(v0, ha_ref[:, dp:]),     # bilinear(hb, Ha_corrupted)
                         mv(v1, hb_ref[:, dp:])],    # bilinear(ha, Hb_corrupted)
                        axis=0)
    o_ref[...] = s + b_ref[0]


# ---------------------------------------------------------------------------
# Kernel wrappers
# ---------------------------------------------------------------------------

def linear(x, w):
    """X @ W, row-tiled, bf16 in / bf16 out (f32 MXU accumulation)."""
    m, kdim = x.shape
    dout = w.shape[1]
    m_pad, tmr = _linear_tiling(m)
    xb = x if x.dtype == jnp.bfloat16 else x.astype(jnp.bfloat16)
    xb = _pad_to(xb, (m_pad, kdim))
    wb = w if w.dtype == jnp.bfloat16 else w.astype(jnp.bfloat16)
    out = pl.pallas_call(
        _linear_kernel,
        out_shape=jax.ShapeDtypeStruct((m_pad, dout), jnp.bfloat16),
        grid_spec=pltpu.PrefetchScalarGridSpec(
            num_scalar_prefetch=0,
            grid=(m_pad // tmr,),
            in_specs=[pl.BlockSpec((tmr, kdim), lambda i: (i, 0)),
                      pl.BlockSpec((kdim, dout), lambda i: (0, 0))],
            out_specs=pl.BlockSpec((tmr, dout), lambda i: (i, 0))),
        compiler_params=pltpu.CompilerParams(
            dimension_semantics=("parallel",),
            vmem_limit_bytes=_VMEM_SMALL),
    )(xb, wb)
    return out if m_pad == m else out[:m]


def gcn_propagate(a_hat, xw, b, prelu, n_pad, tm, tk):
    """H = PReLU(A_hat @ XW + b).

    Returns (H bf16 (n_pad, dcols), column-sums of H f32 (dcols,)).
    a_hat and xw must already be padded to n_pad rows.
    """
    dcols = xw.shape[1]
    n_rows = n_pad // tm
    n_k = n_pad // tk
    xw_resident = (2 * n_pad * dcols * 2) <= _XW_RESIDENT_BYTES

    xw_bf = xw if xw.dtype == jnp.bfloat16 else xw.astype(jnp.bfloat16)
    b2d = b.reshape(1, dcols).astype(jnp.float32)
    slope = jnp.reshape(prelu.astype(jnp.float32), (1,))

    if xw_resident:
        xw_spec = pl.BlockSpec((n_pad, dcols), lambda i, k: (0, 0))
        xw_bytes = 2 * n_pad * dcols * 2
    else:
        xw_spec = pl.BlockSpec((tk, dcols), lambda i, k: (k, 0))
        xw_bytes = 2 * tk * dcols * 2

    # VMEM budget from actual tile math; cap at 48 MiB (v7x has 64 MiB / TC).
    vmem_need = (2 * tm * tk * 2 + xw_bytes + 2 * tm * dcols * 2
                 + 2 * 8 * dcols * 4 + tm * dcols * 4 + (1 << 20))
    vmem_limit = min(48 * 1024 * 1024, max(_VMEM_SMALL, vmem_need))

    h, cs = pl.pallas_call(
        _make_prop_kernel(xw_resident, tk),
        out_shape=[jax.ShapeDtypeStruct((n_pad, dcols), jnp.bfloat16),
                   jax.ShapeDtypeStruct((n_rows, 8, dcols), jnp.float32)],
        grid_spec=pltpu.PrefetchScalarGridSpec(
            num_scalar_prefetch=0,
            grid=(n_rows, n_k),
            in_specs=[pl.BlockSpec((tm, tk), lambda i, k: (i, k)),
                      xw_spec,
                      pl.BlockSpec((1, dcols), lambda i, k: (0, 0)),
                      pl.BlockSpec(memory_space=pltpu.MemorySpace.SMEM)],
            out_specs=[pl.BlockSpec((tm, dcols), lambda i, k: (i, 0)),
                       pl.BlockSpec((1, 8, dcols), lambda i, k: (i, 0, 0))],
            scratch_shapes=[pltpu.VMEM((tm, dcols), jnp.float32)]),
        compiler_params=pltpu.CompilerParams(
            dimension_semantics=("parallel", "arbitrary"),
            vmem_limit_bytes=vmem_limit),
    )(a_hat, xw_bf, b2d, slope)

    colsum = cs[:, 0, :].sum(axis=0)          # (dcols,) f32
    return h, colsum


def discriminator(h2a_f, h2b_f, v, bias, n_pad, d_p):
    """Bilinear scores for all 4 (graph, nodes) pairings as a (4, n_pad) matrix."""
    tn = n_pad if n_pad <= 512 else 256
    return pl.pallas_call(
        _disc_kernel,
        out_shape=jax.ShapeDtypeStruct((4, n_pad), jnp.float32),
        grid_spec=pltpu.PrefetchScalarGridSpec(
            num_scalar_prefetch=0,
            grid=(n_pad // tn,),
            in_specs=[pl.BlockSpec((tn, 2 * d_p), lambda j: (j, 0)),
                      pl.BlockSpec((tn, 2 * d_p), lambda j: (j, 0)),
                      pl.BlockSpec((2, d_p), lambda j: (0, 0)),
                      pl.BlockSpec(memory_space=pltpu.MemorySpace.SMEM)],
            out_specs=pl.BlockSpec((4, tn), lambda j: (0, j))),
        compiler_params=pltpu.CompilerParams(
            dimension_semantics=("parallel",),
            vmem_limit_bytes=_VMEM_SMALL),
    )(h2a_f, h2b_f, v.astype(jnp.bfloat16),
      jnp.reshape(bias.astype(jnp.float32), (1,)))


# ---------------------------------------------------------------------------
# Glue: dense normalized adjacency (GCNConv semantics, add_self_loops=True),
# built directly at the padded size so no per-call O(N^2) pad pass is needed.
# ---------------------------------------------------------------------------

def build_norm_adj(edge_index, edge_weight, num_nodes, n_pad):
    src = edge_index[0].astype(jnp.int32)
    dst = edge_index[1].astype(jnp.int32)
    if edge_weight is None:
        ew = jnp.ones(src.shape[0], dtype=jnp.float32)
    else:
        ew = edge_weight.astype(jnp.float32)
    loop = jnp.arange(num_nodes, dtype=jnp.int32)
    src = jnp.concatenate([src, loop])
    dst = jnp.concatenate([dst, loop])
    ew = jnp.concatenate([ew, jnp.ones(num_nodes, dtype=jnp.float32)])
    a = jnp.zeros((n_pad, n_pad), dtype=jnp.float32).at[dst, src].add(ew)
    deg = a.sum(axis=1)
    d_inv_sqrt = jnp.where(deg > 0, jax.lax.rsqrt(deg), 0.0)
    a_hat = d_inv_sqrt[:, None] * a * d_inv_sqrt[None, :]
    return a_hat.astype(jnp.bfloat16)


# ---------------------------------------------------------------------------
# Model parameters + forward
# ---------------------------------------------------------------------------

def init_params(key, in_channels, latent_dim):
    ks = jax.random.split(key, 8)

    def gcn_params(k):
        k1, k2, k3, k4 = jax.random.split(k, 4)
        return {
            "w1": 0.1 * jax.random.normal(k1, (in_channels, latent_dim), jnp.float32),
            "b1": 0.01 * jax.random.normal(k2, (latent_dim,), jnp.float32),
            "prelu1": jnp.asarray(0.25, jnp.float32),
            "w2": 0.1 * jax.random.normal(k3, (latent_dim, latent_dim), jnp.float32),
            "b2": 0.01 * jax.random.normal(k4, (latent_dim,), jnp.float32),
            "prelu2": jnp.asarray(0.25, jnp.float32),
        }

    return {
        "gcn_real": gcn_params(ks[0]),
        "gcn_diff": gcn_params(ks[1]),
        "readout": {
            "w": 0.1 * jax.random.normal(ks[2], (2 * latent_dim, latent_dim), jnp.float32),
            "b": 0.01 * jax.random.normal(ks[3], (latent_dim,), jnp.float32),
        },
        "disc": {
            "w": 0.1 * jax.random.normal(ks[4], (latent_dim, latent_dim), jnp.float32),
            "b": 0.01 * jax.random.normal(ks[5], (1,), jnp.float32),
        },
    }


def mvgrl_forward(params, x, edge_index, diff_edge_index, diff_edge_weight,
                  corrupted_idx):
    n, fin = x.shape
    d = params["gcn_real"]["w1"].shape[1]
    f_p = _round_up(fin, LANE)
    d_p = _round_up(d, LANE)
    n_pad, tm, tk = _prop_tiling(n)

    # Zero-padded features / weights: padded feature columns stay identically
    # zero through the whole GCN stack and are sliced off at the end.
    xp = _pad_to(x.astype(jnp.float32), (n_pad, f_p)).astype(jnp.bfloat16)

    def pad_gcn(p):
        return {
            "w1": _pad_to(p["w1"], (f_p, d_p)).astype(jnp.bfloat16),
            "b1": _pad_to(p["b1"], (d_p,)).astype(jnp.float32),
            "prelu1": p["prelu1"].astype(jnp.float32),
            "w2": _pad_to(p["w2"], (d_p, d_p)).astype(jnp.bfloat16),
            "b2": _pad_to(p["b2"], (d_p,)).astype(jnp.float32),
            "prelu2": p["prelu2"].astype(jnp.float32),
        }

    pr = pad_gcn(params["gcn_real"])
    pdf = pad_gcn(params["gcn_diff"])

    w_r = params["readout"]["w"].astype(jnp.float32)               # (2D, D)
    w_r1 = _pad_to(w_r[:d], (d_p, d_p))
    w_r2 = _pad_to(w_r[d:], (d_p, d_p))
    b_r = _pad_to(params["readout"]["b"].astype(jnp.float32), (d_p,))
    w_disc = _pad_to(params["disc"]["w"].astype(jnp.float32), (d_p, d_p))
    b_disc = params["disc"]["b"]

    a_real = build_norm_adj(edge_index, None, n, n_pad)            # (n_pad,n_pad) bf16
    a_diff = build_norm_adj(diff_edge_index, diff_edge_weight, n, n_pad)

    # Corrupted permutation, extended so padded rows map to padded rows (those
    # rows hit all-zero adjacency columns, so their contents never matter).
    idx_pad = jnp.concatenate([corrupted_idx.astype(jnp.int32),
                               jnp.arange(n, n_pad, dtype=jnp.int32)])

    pad_rows = float(n_pad - n)

    def view_forward(p, a_hat):
        # Layer 1: clean + corrupted fused along the feature axis so A_hat is
        # streamed ONCE for both passes ((x[perm]) @ W1 == (x @ W1)[perm]).
        xw1 = linear(xp, p["w1"])                                  # (n_pad, d_p) bf16
        xw1_f = jnp.concatenate([xw1, xw1[idx_pad]], axis=1)       # (n_pad, 2*d_p)
        b1_f = jnp.concatenate([p["b1"], p["b1"]])
        h1_f, cs1 = gcn_propagate(a_hat, xw1_f, b1_f, p["prelu1"], n_pad, tm, tk)

        # Layer 2: (n_pad, 2*d_p) -> (2*n_pad, d_p) reshape is free (row-major),
        # so one linear kernel transforms clean and corrupted halves together.
        xw2_f = linear(h1_f.reshape(2 * n_pad, d_p), p["w2"]).reshape(n_pad, 2 * d_p)
        b2_f = jnp.concatenate([p["b2"], p["b2"]])
        h2_f, cs2 = gcn_propagate(a_hat, xw2_f, b2_f, p["prelu2"], n_pad, tm, tk)
        return h2_f, cs1, cs2

    h2a_f, cs1a, cs2a = view_forward(pr, a_real)
    h2b_f, cs1b, cs2b = view_forward(pdf, a_diff)

    # Readout: the O(N*D) column sums were folded into the propagation kernel;
    # subtract the exact contribution of padded rows (= PReLU(bias) each) and
    # finish with the tiny O(D^2) sigmoid(linear) in plain JAX.
    def graph_readout(cs1, cs2, p):
        def mean_clean(cs, b_pad, slope):
            corr = jnp.where(b_pad > 0, b_pad, slope * b_pad) * pad_rows
            return (cs[:d_p] - corr) / n
        m1 = mean_clean(cs1, p["b1"], p["prelu1"])
        m2 = mean_clean(cs2, p["b2"], p["prelu2"])
        return jax.nn.sigmoid(m1 @ w_r1 + m2 @ w_r2 + b_r)         # (d_p,)

    ha_g = graph_readout(cs1a, cs2a, pr)
    hb_g = graph_readout(cs1b, cs2b, pdf)

    # Discriminator: bilinear(x1, x2) = x1^T W x2 + b.  Precompute the graph
    # side once: v0 = hb @ W (pairs with Ha / Ha_c), v1 = ha @ W (Hb / Hb_c).
    v = jnp.stack([hb_g @ w_disc, ha_g @ w_disc], axis=0)          # (2, d_p) f32
    scores = discriminator(h2a_f, h2b_f, v, b_disc, n_pad, d_p)    # (4, n_pad)
    disc_out = scores[:, :n].reshape(-1)                           # (4N,)

    graph_emb = (ha_g + hb_g)[:d]                                  # (D,)
    node_emb = (h2a_f[:n, :d].astype(jnp.float32)
                + h2b_f[:n, :d].astype(jnp.float32))               # (N, D)
    return disc_out, graph_emb, node_emb


# ---------------------------------------------------------------------------
# Demo
# ---------------------------------------------------------------------------

if __name__ == "__main__":
    N, IN_CH, LATENT = 8, 16, 32

    key = jax.random.PRNGKey(0)
    k_x, k_w, k_p, k_perm = jax.random.split(key, 4)

    x = jax.random.normal(k_x, (N, IN_CH), jnp.float32)

    # original view: bidirectional ring graph
    fwd_idx = jnp.arange(N, dtype=jnp.int32)
    nxt = (fwd_idx + 1) % N
    edge_index = jnp.stack([jnp.concatenate([fwd_idx, nxt]),
                            jnp.concatenate([nxt, fwd_idx])], axis=0)   # (2, 2N)

    # diffused view: fully connected (no explicit self loops) with weights
    src = jnp.repeat(jnp.arange(N, dtype=jnp.int32), N)
    dst = jnp.tile(jnp.arange(N, dtype=jnp.int32), N)
    mask = src != dst
    diff_edge_index = jnp.stack([src[mask], dst[mask]], axis=0)         # (2, N*(N-1))
    diff_edge_weight = 0.5 + 0.5 * jax.random.uniform(
        k_w, (diff_edge_index.shape[1],), jnp.float32)

    corrupted_idx = jax.random.permutation(k_perm, N)

    params = init_params(k_p, IN_CH, LATENT)

    forward = jax.jit(mvgrl_forward)
    disc_out, graph_emb, node_emb = forward(
        params, x, edge_index, diff_edge_index, diff_edge_weight, corrupted_idx)
    jax.block_until_ready((disc_out, graph_emb, node_emb))

    assert disc_out.shape == (4 * N,)
    assert graph_emb.shape == (LATENT,)
    assert node_emb.shape == (N, LATENT)
    assert bool(jnp.all(jnp.isfinite(disc_out)))
    assert bool(jnp.all(jnp.isfinite(graph_emb)))
    assert bool(jnp.all(jnp.isfinite(node_emb)))

    # Extra check of the tiled (multi-row-block, multi-k-block, VMEM-resident
    # XW) propagation path against a plain-JAX reference computed from the
    # same bf16 inputs (loose tolerance for bf16 output rounding / sum order).
    n_t = 600
    n_pad_t, tm_t, tk_t = _prop_tiling(n_t)
    k1, k2 = jax.random.split(jax.random.PRNGKey(1))
    valid = jnp.arange(n_pad_t) < n_t
    a_t = jax.random.uniform(k1, (n_pad_t, n_pad_t), jnp.float32)
    a_t = jnp.where(valid[:, None] & valid[None, :], a_t, 0.0).astype(jnp.bfloat16)
    xw_t = jax.random.normal(k2, (n_pad_t, 256), jnp.float32).astype(jnp.bfloat16)
    b_t = jnp.linspace(-0.5, 0.5, 256, dtype=jnp.float32)
    slope_t = jnp.asarray(0.2, jnp.float32)

    h_t, cs_t = gcn_propagate(a_t, xw_t, b_t, slope_t, n_pad_t, tm_t, tk_t)
    jax.block_until_ready((h_t, cs_t))

    ref = jnp.dot(a_t.astype(jnp.float32), xw_t.astype(jnp.float32)) + b_t[None, :]
    ref = jnp.where(ref > 0, ref, slope_t * ref)
    scale = float(jnp.max(jnp.abs(ref))) + 1e-6
    assert float(jnp.max(jnp.abs(h_t.astype(jnp.float32) - ref))) < 0.05 * scale + 1e-2
    cs_ref = ref.sum(axis=0)
    cs_scale = float(jnp.max(jnp.abs(cs_ref))) + 1e-6
    assert float(jnp.max(jnp.abs(cs_t - cs_ref))) < 0.02 * cs_scale + 0.1

    print("KERNEL_OK")
</pallas_src>

<mosaic_0001>
module attributes {stable_mosaic.version = 11 : i64} {
  func.func @_linear_kernel(%arg0: i32, %arg1: memref<8x128xbf16, #tpu.memory_space<vmem>>, %arg2: memref<128x128xbf16, #tpu.memory_space<vmem>>, %arg3: memref<8x128xbf16, #tpu.memory_space<vmem>>) attributes {dimension_semantics = [#tpu.dimension_semantics<parallel>], iteration_bounds = array<i64: 1>, scalar_prefetch = 0 : i64, scratch_operands = 0 : i64, tpu.core_type = #tpu.core_type<tc>, window_params = [{transform_indices = @transform_0, window_bounds = array<i64: 8, 128>}, {pipeline_mode = #tpu.pipeline_mode<synchronous>, transform_indices = @transform_1, window_bounds = array<i64: 128, 128>}, {transform_indices = @transform_2, window_bounds = array<i64: 8, 128>}]} {
    %c0 = arith.constant 0 : index
    %c0_0 = arith.constant 0 : index
    %0 = vector.load %arg1[%c0, %c0_0] : memref<8x128xbf16, #tpu.memory_space<vmem>>, vector<8x128xbf16>
    %c0_1 = arith.constant 0 : index
    %c0_2 = arith.constant 0 : index
    %1 = vector.load %arg2[%c0_1, %c0_2] : memref<128x128xbf16, #tpu.memory_space<vmem>>, vector<128x128xbf16>
    %cst = arith.constant dense<0.000000e+00> : vector<8x128xf32>
    %2 = tpu.matmul %0, %1, %cst {dimension_numbers = #tpu.dot_dimension_numbers<[1], [0], [0], [1], [0, 0, 1, 1], [], []>} : vector<8x128xbf16>, vector<128x128xbf16>, vector<8x128xf32> -> vector<8x128xf32>
    %3 = arith.truncf %2 : vector<8x128xf32> to vector<8x128xbf16>
    %c0_3 = arith.constant 0 : index
    %c0_4 = arith.constant 0 : index
    %4 = vector.load %arg3[%c0_3, %c0_4] : memref<8x128xbf16, #tpu.memory_space<vmem>>, vector<8x128xbf16>
    tpu.vector_store %arg3[%c0_3, %c0_4], %3 {strides = array<i32>} : memref<8x128xbf16, #tpu.memory_space<vmem>>, vector<8x128xbf16>,
    return
  }
  func.func @transform_0(%arg0: i32) -> (i32, i32) {
    %c0_i32 = arith.constant 0 : i32
    %c0_i32_0 = arith.constant 0 : i32
    return %arg0, %c0_i32 : i32, i32
  }
  func.func @transform_1(%arg0: i32) -> (i32, i32) {
    %c0_i32 = arith.constant 0 : i32
    %c0_i32_0 = arith.constant 0 : i32
    %c0_i32_1 = arith.constant 0 : i32
    return %c0_i32, %c0_i32_0 : i32, i32
  }
  func.func @transform_2(%arg0: i32) -> (i32, i32) {
    %c0_i32 = arith.constant 0 : i32
    %c0_i32_0 = arith.constant 0 : i32
    return %arg0, %c0_i32 : i32, i32
  }
}

module attributes {stable_mosaic.version = 11 : i64} {
  func.func @kernel(%arg0: i32, %arg1: i32, %arg2: memref<8x8xbf16, #tpu.memory_space<vmem>>, %arg3: memref<8x256xbf16, #tpu.memory_space<vmem>>, %arg4: memref<1x256xf32, #tpu.memory_space<vmem>>, %arg5: memref<1xf32, #tpu.memory_space<smem>>, %arg6: memref<8x256xbf16, #tpu.memory_space<vmem>>, %arg7: memref<1x8x256xf32, #tpu.memory_space<vmem>>, %arg8: memref<8x256xf32, #tpu.memory_space<vmem>>) attributes {dimension_semantics = [#tpu.dimension_semantics<parallel>, #tpu.dimension_semantics<arbitrary>], iteration_bounds = array<i64: 1, 1>, scalar_prefetch = 0 : i64, scratch_operands = 1 : i64, tpu.core_type = #tpu.core_type<tc>, window_params = [{transform_indices = @transform_0, window_bounds = array<i64: 8, 8>}, {pipeline_mode = #tpu.pipeline_mode<synchronous>, transform_indices = @transform_1, window_bounds = array<i64: 8, 256>}, {pipeline_mode = #tpu.pipeline_mode<synchronous>, transform_indices = @transform_2, window_bounds = array<i64: 1, 256>}, {transform_indices = @transform_3, window_bounds = array<i64: 1>}, {transform_indices = @transform_4, window_bounds = array<i64: 8, 256>}, {transform_indices = @transform_5, window_bounds = array<i64: 1, 8, 256>}]} {
    %c0_i32 = arith.constant 0 : i32
    %0 = arith.cmpi eq, %arg1, %c0_i32 : i32
    %1 = arith.extui %0 : i1 to i32
    %c0_i32_0 = arith.constant 0 : i32
    %2 = arith.cmpi ne, %1, %c0_i32_0 : i32
    scf.if %2 {
      %cst_9 = arith.constant 0.000000e+00 : f32
      %15 = vector.broadcast %cst_9 : f32 to vector<8x256xf32>
      %c0_10 = arith.constant 0 : index
      %c0_11 = arith.constant 0 : index
      %16 = vector.load %arg8[%c0_10, %c0_11] : memref<8x256xf32, #tpu.memory_space<vmem>>, vector<8x256xf32>
      tpu.vector_store %arg8[%c0_10, %c0_11], %15 {strides = array<i32>} : memref<8x256xf32, #tpu.memory_space<vmem>>, vector<8x256xf32>,
    } else {
    }
    %c8_i32 = arith.constant 8 : i32
    %3 = arith.muli %arg1, %c8_i32 : i32
    %4 = tpu.assume_multiple %3, 8 : i32
    %5 = arith.index_cast %4 : i32 to index
    %c0 = arith.constant 0 : index
    %6 = vector.load %arg3[%5, %c0] : memref<8x256xbf16, #tpu.memory_space<vmem>>, vector<8x256xbf16>
    %c0_1 = arith.constant 0 : index
    %c0_2 = arith.constant 0 : index
    %7 = vector.load %arg8[%c0_1, %c0_2] : memref<8x256xf32, #tpu.memory_space<vmem>>, vector<8x256xf32>
    %c0_3 = arith.constant 0 : index
    %c0_4 = arith.constant 0 : index
    %8 = vector.load %arg2[%c0_3, %c0_4] : memref<8x8xbf16, #tpu.memory_space<vmem>>, vector<8x8xbf16>
    %cst = arith.constant dense<0.000000e+00> : vector<8x256xf32>
    %9 = tpu.matmul %8, %6, %cst {dimension_numbers = #tpu.dot_dimension_numbers<[1], [0], [0], [1], [0, 0, 1, 1], [], []>} : vector<8x8xbf16>, vector<8x256xbf16>, vector<8x256xf32> -> vector<8x256xf32>
    %10 = arith.addf %7, %9 : vector<8x256xf32>
    %c0_5 = arith.constant 0 : index
    %c0_6 = arith.constant 0 : index
    %11 = vector.load %arg8[%c0_5, %c0_6] : memref<8x256xf32, #tpu.memory_space<vmem>>, vector<8x256xf32>
    tpu.vector_store %arg8[%c0_5, %c0_6], %10 {strides = array<i32>} : memref<8x256xf32, #tpu.memory_space<vmem>>, vector<8x256xf32>,
    %c0_i32_7 = arith.constant 0 : i32
    %12 = arith.cmpi eq, %arg1, %c0_i32_7 : i32
    %13 = arith.extui %12 : i1 to i32
    %c0_i32_8 = arith.constant 0 : i32
    %14 = arith.cmpi ne, %13, %c0_i32_8 : i32
    scf.if %14 {
      %c0_9 = arith.constant 0 : index
      %c0_10 = arith.constant 0 : index
      %15 = vector.load %arg8[%c0_9, %c0_10] : memref<8x256xf32, #tpu.memory_space<vmem>>, vector<8x256xf32>
      %c0_11 = arith.constant 0 : index
      %c0_12 = arith.constant 0 : index
      %16 = vector.load %arg4[%c0_11, %c0_12] : memref<1x256xf32, #tpu.memory_space<vmem>>, vector<1x256xf32>
      %17 = vector.broadcast %16 : vector<1x256xf32> to vector<8x256xf32>
      %18 = arith.addf %15, %17 : vector<8x256xf32>
      %c0_13 = arith.constant 0 : index
      %19 = memref.load %arg5[%c0_13] : memref<1xf32, #tpu.memory_space<smem>>
      %cst_14 = arith.constant 0.000000e+00 : f32
      %20 = vector.broadcast %cst_14 : f32 to vector<8x256xf32>
      %21 = arith.cmpf ogt, %18, %20 : vector<8x256xf32>
      %22 = vector.broadcast %19 : f32 to vector<8x256xf32>
      %23 = arith.mulf %18, %22 : vector<8x256xf32>
      %24 = arith.select %21, %18, %23 : vector<8x256xi1>, vector<8x256xf32>
      %25 = arith.truncf %24 : vector<8x256xf32> to vector<8x256xbf16>
      %c0_15 = arith.constant 0 : index
      %c0_16 = arith.constant 0 : index
      %26 = vector.load %arg6[%c0_15, %c0_16] : memref<8x256xbf16, #tpu.memory_space<vmem>>, vector<8x256xbf16>
      tpu.vector_store %arg6[%c0_15, %c0_16], %25 {strides = array<i32>} : memref<8x256xbf16, #tpu.memory_space<vmem>>, vector<8x256xbf16>,
      %cst_17 = arith.constant dense<0.000000e+00> : vector<256xf32>
      %27 = vector.multi_reduction <add>, %24, %cst_17 [0] : vector<8x256xf32> to vector<256xf32>
      %28 = vector.shape_cast %27 : vector<256xf32> to vector<1x256xf32>
      %29 = vector.shape_cast %28 : vector<1x256xf32> to vector<1x1x256xf32>
      %30 = vector.shape_cast %29 : vector<1x1x256xf32> to vector<1x1x256xf32>
      %31 = vector.broadcast %30 : vector<1x1x256xf32> to vector<1x8x256xf32>
      %c0_18 = arith.constant 0 : index
      %c0_19 = arith.constant 0 : index
      %c0_20 = arith.constant 0 : index
      %32 = vector.load %arg7[%c0_18, %c0_19, %c0_20] : memref<1x8x256xf32, #tpu.memory_space<vmem>>, vector<1x8x256xf32>
      tpu.vector_store %arg7[%c0_18, %c0_19, %c0_20], %31 {strides = array<i32>} : memref<1x8x256xf32, #tpu.memory_space<vmem>>, vector<1x8x256xf32>,
    } else {
    }
    return
  }
  func.func @transform_0(%arg0: i32, %arg1: i32) -> (i32, i32) {
    %c0_i32 = arith.constant 0 : i32
    return %arg0, %arg1 : i32, i32
  }
  func.func @transform_1(%arg0: i32, %arg1: i32) -> (i32, i32) {
    %c0_i32 = arith.constant 0 : i32
    %c0_i32_0 = arith.constant 0 : i32
    %c0_i32_1 = arith.constant 0 : i32
    return %c0_i32, %c0_i32_0 : i32, i32
  }
  func.func @transform_2(%arg0: i32, %arg1: i32) -> (i32, i32) {
    %c0_i32 = arith.constant 0 : i32
    %c0_i32_0 = arith.constant 0 : i32
    %c0_i32_1 = arith.constant 0 : i32
    return %c0_i32, %c0_i32_0 : i32, i32
  }
  func.func @transform_3(%arg0: i32, %arg1: i32) -> i32 {
    %c0_i32 = arith.constant 0 : i32
    %c0_i32_0 = arith.constant 0 : i32
    return %c0_i32 : i32
  }
  func.func @transform_4(%arg0: i32, %arg1: i32) -> (i32, i32) {
    %c0_i32 = arith.constant 0 : i32
    %c0_i32_0 = arith.constant 0 : i32
    return %arg0, %c0_i32 : i32, i32
  }
  func.func @transform_5(%arg0: i32, %arg1: i32) -> (i32, i32, i32) {
    %c0_i32 = arith.constant 0 : i32
    %c0_i32_0 = arith.constant 0 : i32
    %c0_i32_1 = arith.constant 0 : i32
    return %arg0, %c0_i32, %c0_i32_0 : i32, i32, i32
  }
}

module attributes {stable_mosaic.version = 11 : i64} {
  func.func @_linear_kernel(%arg0: i32, %arg1: memref<16x128xbf16, #tpu.memory_space<vmem>>, %arg2: memref<128x128xbf16, #tpu.memory_space<vmem>>, %arg3: memref<16x128xbf16, #tpu.memory_space<vmem>>) attributes {dimension_semantics = [#tpu.dimension_semantics<parallel>], iteration_bounds = array<i64: 1>, scalar_prefetch = 0 : i64, scratch_operands = 0 : i64, tpu.core_type = #tpu.core_type<tc>, window_params = [{transform_indices = @transform_0, window_bounds = array<i64: 16, 128>}, {pipeline_mode = #tpu.pipeline_mode<synchronous>, transform_indices = @transform_1, window_bounds = array<i64: 128, 128>}, {transform_indices = @transform_2, window_bounds = array<i64: 16, 128>}]} {
    %c0 = arith.constant 0 : index
    %c0_0 = arith.constant 0 : index
    %0 = vector.load %arg1[%c0, %c0_0] : memref<16x128xbf16, #tpu.memory_space<vmem>>, vector<16x128xbf16>
    %c0_1 = arith.constant 0 : index
    %c0_2 = arith.constant 0 : index
    %1 = vector.load %arg2[%c0_1, %c0_2] : memref<128x128xbf16, #tpu.memory_space<vmem>>, vector<128x128xbf16>
    %cst = arith.constant dense<0.000000e+00> : vector<16x128xf32>
    %2 = tpu.matmul %0, %1, %cst {dimension_numbers = #tpu.dot_dimension_numbers<[1], [0], [0], [1], [0, 0, 1, 1], [], []>} : vector<16x128xbf16>, vector<128x128xbf16>, vector<16x128xf32> -> vector<16x128xf32>
    %3 = arith.truncf %2 : vector<16x128xf32> to vector<16x128xbf16>
    %c0_3 = arith.constant 0 : index
    %c0_4 = arith.constant 0 : index
    %4 = vector.load %arg3[%c0_3, %c0_4] : memref<16x128xbf16, #tpu.memory_space<vmem>>, vector<16x128xbf16>
    tpu.vector_store %arg3[%c0_3, %c0_4], %3 {strides = array<i32>} : memref<16x128xbf16, #tpu.memory_space<vmem>>, vector<16x128xbf16>,
    return
  }
  func.func @transform_0(%arg0: i32) -> (i32, i32) {
    %c0_i32 = arith.constant 0 : i32
    %c0_i32_0 = arith.constant 0 : i32
    return %arg0, %c0_i32 : i32, i32
  }
  func.func @transform_1(%arg0: i32) -> (i32, i32) {
    %c0_i32 = arith.constant 0 : i32
    %c0_i32_0 = arith.constant 0 : i32
    %c0_i32_1 = arith.constant 0 : i32
    return %c0_i32, %c0_i32_0 : i32, i32
  }
  func.func @transform_2(%arg0: i32) -> (i32, i32) {
    %c0_i32 = arith.constant 0 : i32
    %c0_i32_0 = arith.constant 0 : i32
    return %arg0, %c0_i32 : i32, i32
  }
}

module attributes {stable_mosaic.version = 11 : i64} {
  func.func @_disc_kernel(%arg0: i32, %arg1: memref<8x256xbf16, #tpu.memory_space<vmem>>, %arg2: memref<8x256xbf16, #tpu.memory_space<vmem>>, %arg3: memref<2x128xbf16, #tpu.memory_space<vmem>>, %arg4: memref<1xf32, #tpu.memory_space<smem>>, %arg5: memref<4x8xf32, #tpu.memory_space<vmem>>) attributes {dimension_semantics = [#tpu.dimension_semantics<parallel>], iteration_bounds = array<i64: 1>, scalar_prefetch = 0 : i64, scratch_operands = 0 : i64, tpu.core_type = #tpu.core_type<tc>, window_params = [{transform_indices = @transform_0, window_bounds = array<i64: 8, 256>}, {transform_indices = @transform_1, window_bounds = array<i64: 8, 256>}, {pipeline_mode = #tpu.pipeline_mode<synchronous>, transform_indices = @transform_2, window_bounds = array<i64: 2, 128>}, {transform_indices = @transform_3, window_bounds = array<i64: 1>}, {transform_indices = @transform_4, window_bounds = array<i64: 4, 8>}]} {
    %c0 = arith.constant 0 : index
    %c0_0 = arith.constant 0 : index
    %0 = vector.load %arg3[%c0, %c0_0] : memref<2x128xbf16, #tpu.memory_space<vmem>>, vector<1x128xbf16>
    %c1 = arith.constant 1 : index
    %c0_1 = arith.constant 0 : index
    %1 = vector.load %arg3[%c1, %c0_1] : memref<2x128xbf16, #tpu.memory_space<vmem>>, vector<1x128xbf16>
    %c0_2 = arith.constant 0 : index
    %c0_3 = arith.constant 0 : index
    %2 = vector.load %arg1[%c0_2, %c0_3] : memref<8x256xbf16, #tpu.memory_space<vmem>>, vector<8x128xbf16>
    %cst = arith.constant dense<0.000000e+00> : vector<1x8xf32>
    %3 = tpu.matmul %0, %2, %cst {dimension_numbers = #tpu.dot_dimension_numbers<[1], [1], [0], [0], [0, 0, 1, 0], [], []>} : vector<1x128xbf16>, vector<8x128xbf16>, vector<1x8xf32> -> vector<1x8xf32>
    %c0_4 = arith.constant 0 : index
    %c0_5 = arith.constant 0 : index
    %4 = vector.load %arg2[%c0_4, %c0_5] : memref<8x256xbf16, #tpu.memory_space<vmem>>, vector<8x128xbf16>
    %cst_6 = arith.constant dense<0.000000e+00> : vector<1x8xf32>
    %5 = tpu.matmul %1, %4, %cst_6 {dimension_numbers = #tpu.dot_dimension_numbers<[1], [1], [0], [0], [0, 0, 1, 0], [], []>} : vector<1x128xbf16>, vector<8x128xbf16>, vector<1x8xf32> -> vector<1x8xf32>
    %c0_7 = arith.constant 0 : index
    %c128 = arith.constant 128 : index
    %6 = vector.load %arg1[%c0_7, %c128] : memref<8x256xbf16, #tpu.memory_space<vmem>>, vector<8x128xbf16>
    %cst_8 = arith.constant dense<0.000000e+00> : vector<1x8xf32>
    %7 = tpu.matmul %0, %6, %cst_8 {dimension_numbers = #tpu.dot_dimension_numbers<[1], [1], [0], [0], [0, 0, 1, 0], [], []>} : vector<1x128xbf16>, vector<8x128xbf16>, vector<1x8xf32> -> vector<1x8xf32>
    %c0_9 = arith.constant 0 : index
    %c128_10 = arith.constant 128 : index
    %8 = vector.load %arg2[%c0_9, %c128_10] : memref<8x256xbf16, #tpu.memory_space<vmem>>, vector<8x128xbf16>
    %cst_11 = arith.constant dense<0.000000e+00> : vector<1x8xf32>
    %9 = tpu.matmul %1, %8, %cst_11 {dimension_numbers = #tpu.dot_dimension_numbers<[1], [1], [0], [0], [0, 0, 1, 0], [], []>} : vector<1x128xbf16>, vector<8x128xbf16>, vector<1x8xf32> -> vector<1x8xf32>
    %10 = tpu.concatenate %3, %5, %7, %9 in 0 : vector<1x8xf32>, vector<1x8xf32>, vector<1x8xf32>, vector<1x8xf32> -> vector<4x8xf32>
    %c0_12 = arith.constant 0 : index
    %11 = memref.load %arg4[%c0_12] : memref<1xf32, #tpu.memory_space<smem>>
    %12 = vector.broadcast %11 : f32 to vector<4x8xf32>
    %13 = arith.addf %10, %12 : vector<4x8xf32>
    %c0_13 = arith.constant 0 : index
    %c0_14 = arith.constant 0 : index
    %14 = vector.load %arg5[%c0_13, %c0_14] : memref<4x8xf32, #tpu.memory_space<vmem>>, vector<4x8xf32>
    tpu.vector_store %arg5[%c0_13, %c0_14], %13 {strides = array<i32>} : memref<4x8xf32, #tpu.memory_space<vmem>>, vector<4x8xf32>,
    return
  }
  func.func @transform_0(%arg0: i32) -> (i32, i32) {
    %c0_i32 = arith.constant 0 : i32
    %c0_i32_0 = arith.constant 0 : i32
    return %arg0, %c0_i32 : i32, i32
  }
  func.func @transform_1(%arg0: i32) -> (i32, i32) {
    %c0_i32 = arith.constant 0 : i32
    %c0_i32_0 = arith.constant 0 : i32
    return %arg0, %c0_i32 : i32, i32
  }
  func.func @transform_2(%arg0: i32) -> (i32, i32) {
    %c0_i32 = arith.constant 0 : i32
    %c0_i32_0 = arith.constant 0 : i32
    %c0_i32_1 = arith.constant 0 : i32
    return %c0_i32, %c0_i32_0 : i32, i32
  }
  func.func @transform_3(%arg0: i32) -> i32 {
    %c0_i32 = arith.constant 0 : i32
    %c0_i32_0 = arith.constant 0 : i32
    return %c0_i32 : i32
  }
  func.func @transform_4(%arg0: i32) -> (i32, i32) {
    %c0_i32 = arith.constant 0 : i32
    %c0_i32_0 = arith.constant 0 : i32
    return %c0_i32, %arg0 : i32, i32
  }
}

</mosaic_0001>

<llo_original>
// kernel: mvgrl_forward.13
$region0: #{mvgrl_forward.13}
  #allocation0 [shape = 'u32[]', space=smem, size = 0x4, offset = 0x4, fixed_abs, tag = 'smem constant byte address 0x4 - core index']
  #allocation1 [shape = 'u32[72,128]{1,0:T(1,128)}', space=vmem, size = 0x9000, scoped, tag = 'internal scratch']
  %s0 = inlined_call_operand.vmem [shape: bf16[8,128], index: 0, kind: input, shape index: {}]
  %s1 = inlined_call_operand.vmem [shape: bf16[128,128], index: 1, kind: input, shape index: {}]
  %s2 = inlined_call_operand.vmem [shape: bf16[8,128], index: 2, kind: output, shape index: {}]
  %s3 = sld [smem:[#allocation0]]
  $region18: #{mvgrl_forward.13} parent=0
    _
  %s5 = ssub.s32 1, %s3
  %s6 = scalar_select 0, %s5, %s3
  // Predicated region
  $region2: #{mvgrl_forward.13} parent=0 // pred_check
    _
  $region3: #{mvgrl_forward.13} parent=0 // pred_check_branch
    %8 = sbr.rel (0) target = $region5
  $region4: #{mvgrl_forward.13} parent=0 // pred_region
    _
  $region5: #{mvgrl_forward.13} parent=0 // pred_fallthru
    _
  // Predicated region
  $region6: #{mvgrl_forward.13} parent=0 // pred_check
    _
  $region7: #{mvgrl_forward.13} parent=0 // pred_check_branch
    %10 = sbr.rel (0) target = $region9
  $region8: #{mvgrl_forward.13} parent=0 // pred_region
    _
  $region9: #{mvgrl_forward.13} parent=0 // pred_fallthru
    _
  %v11 = vld [vmem:[%s0] sm:$0xf]
  %v12 = vld [vmem:[%s1] sm:$0xf]
  %v13 = vld [vmem:[%s1 + $0x4] sm:$0xf]
  %v14 = vld [vmem:[%s1 + $0x8] sm:$0xf]
  %v15 = vld [vmem:[%s1 + $0xc] sm:$0xf]
  %v16 = vld [vmem:[%s1 + $0x10] sm:$0xf]
  %v17 = vld [vmem:[%s1 + $0x14] sm:$0xf]
  %v18 = vld [vmem:[%s1 + $0x18] sm:$0xf]
  %v19 = vld [vmem:[%s1 + $0x1c] sm:$0xf]
  %v20 = vld [vmem:[%s1 + $0x20] sm:$0xf]
  %v21 = vld [vmem:[%s1 + $0x24] sm:$0xf]
  %v22 = vld [vmem:[%s1 + $0x28] sm:$0xf]
  %v23 = vld [vmem:[%s1 + $0x2c] sm:$0xf]
  %v24 = vld [vmem:[%s1 + $0x30] sm:$0xf]
  %v25 = vld [vmem:[%s1 + $0x34] sm:$0xf]
  %v26 = vld [vmem:[%s1 + $0x38] sm:$0xf]
  %v27 = vld [vmem:[%s1 + $0x3c] sm:$0xf]
  %v44 = vunpack.c.l.b16 %v12
  %v45 = vunpack.c.l.b16 %v13
  %v46 = vunpack.c.l.b16 %v14
  %v47 = vunpack.c.l.b16 %v15
  %v48 = vunpack.c.l.b16 %v16
  %v49 = vunpack.c.l.b16 %v17
  %v50 = vunpack.c.l.b16 %v18
  %v51 = vunpack.c.l.b16 %v19
  %v52 = vunpack.c.l.b16 %v20
  %v53 = vunpack.c.l.b16 %v21
  %v54 = vunpack.c.l.b16 %v22
  %v55 = vunpack.c.l.b16 %v23
  %v56 = vunpack.c.l.b16 %v24
  %v57 = vunpack.c.l.b16 %v25
  %v58 = vunpack.c.l.b16 %v26
  %v59 = vunpack.c.l.b16 %v27
  %v60 = vpack.c.b16 %v45, %v44
  %v61 = vpack.c.b16 %v47, %v46
  %v62 = vpack.c.b16 %v49, %v48
  %v63 = vpack.c.b16 %v51, %v50
  %v64 = vpack.c.b16 %v53, %v52
  %v65 = vpack.c.b16 %v55, %v54
  %v66 = vpack.c.b16 %v57, %v56
  %v67 = vpack.c.b16 %v59, %v58
  %76 = vmatpush.bf16.msra.mxu0 %v67
  %77 = vmatpush.bf16.msra.mxu0 %v66
  %78 = vmatpush.bf16.msra.mxu0 %v65
  %79 = vmatpush.bf16.msra.mxu0 %v64
  %80 = vmatpush.bf16.msra.mxu0 %v63
  %81 = vmatpush.bf16.msra.mxu0 %v62
  %82 = vmatpush.bf16.msra.mxu0 %v61
  %83 = vmatpush.bf16.msra.mxu0 %v60
  %84 = vmatmul.bf16.gmra.mxu0 %v11
  %v85 = vpop.f32.mrf.mxu0
  %v86 = vadd.f32 0.0, %v85
  %v87 = vpop.f32.mrf.mxu0
  %88 = vdwg.mxu0
  %v89 = vpack.c.bf16 %v86, %v86
  %90 = vst [vmem:[%s2] sm:$0xf] %v89
  // Predicated region
  $region10: #{mvgrl_forward.13} parent=0 // pred_check
    _
  $region11: #{mvgrl_forward.13} parent=0 // pred_check_branch
    %92 = sbr.rel (0) target = $region13
  $region12: #{mvgrl_forward.13} parent=0 // pred_region
    _
  $region13: #{mvgrl_forward.13} parent=0 // pred_fallthru
    _
  // Predicated region
  $region14: #{mvgrl_forward.13} parent=0 // pred_check
    _
  $region15: #{mvgrl_forward.13} parent=0 // pred_check_branch
    %94 = sbr.rel (0) target = $region17
  $region16: #{mvgrl_forward.13} parent=0 // pred_region
    _
  $region17: #{mvgrl_forward.13} parent=0 // pred_fallthru
    _

// kernel: mvgrl_forward.14
$region0: #{mvgrl_forward.14}
  #allocation0 [shape = 'u32[]', space=smem, size = 0x4, offset = 0x4, fixed_abs, tag = 'smem constant byte address 0x4 - core index']
  #allocation1 [shape = 'u32[72,128]{1,0:T(1,128)}', space=vmem, size = 0x9000, scoped, tag = 'internal scratch']
  #allocation2 [shape = 'f32[8,256]{1,0:T(8,128)}', space=vmem, size = 0x2000, scoped, tag = 'scratch operand']
  #allocation3 [shape = 'f32[1]{0:T(128)S(6)}', space=smem, size = 0x200, scoped, tag = 'scoped memory for mvgrl_forward.14']
  %s0 = inlined_call_operand.vmem [shape: bf16[8,8], index: 0, kind: input, shape index: {}]
  %s1 = inlined_call_operand.vmem [shape: bf16[8,256], index: 1, kind: input, shape index: {}]
  %s2 = inlined_call_operand.vmem [shape: f32[1,256], index: 2, kind: input, shape index: {}]
  %s3 = inlined_call_operand.<no memory space> [shape: f32[1], index: 3, kind: input, shape index: {}]
  %s4 = inlined_call_operand.vmem [shape: bf16[8,256], index: 4, kind: output, shape index: {0}]
  %s5 = inlined_call_operand.vmem [shape: f32[1,8,256], index: 5, kind: output, shape index: {1}]
  %6 = xla_tuple %s4, %s5
  %s7 = sld [smem:[#allocation0]]
  $region42: #{mvgrl_forward.14} parent=0
    _
  %s9 = ssub.s32 1, %s7
  %s10 = scalar_select 0, %s9, %s7
  %11 = sst [smem:[#allocation3]] %s3
  // Predicated region
  $region2: #{mvgrl_forward.14} parent=0 // pred_check
    _
  $region3: #{mvgrl_forward.14} parent=0 // pred_check_branch
    %13 = sbr.rel (0) target = $region5
  $region4: #{mvgrl_forward.14} parent=0 // pred_region
    _
  $region5: #{mvgrl_forward.14} parent=0 // pred_fallthru
    _
  // Predicated region
  $region6: #{mvgrl_forward.14} parent=0 // pred_check
    _
  $region7: #{mvgrl_forward.14} parent=0 // pred_check_branch
    %15 = sbr.rel (0) target = $region9
  $region8: #{mvgrl_forward.14} parent=0 // pred_region
    _
  $region9: #{mvgrl_forward.14} parent=0 // pred_fallthru
    _
  // Predicated region
  $region10: #{mvgrl_forward.14} parent=0 // pred_check
    _
  $region11: #{mvgrl_forward.14} parent=0 // pred_check_branch
    %17 = sbr.rel (0) target = $region13
  $region12: #{mvgrl_forward.14} parent=0 // pred_region
    _
  $region13: #{mvgrl_forward.14} parent=0 // pred_fallthru
    _
  // Predicated region
  $region14: #{mvgrl_forward.14} parent=0 // pred_check
    _
  $region15: #{mvgrl_forward.14} parent=0 // pred_check_branch
    %19 = sbr.rel (0) target = $region17
  $region16: #{mvgrl_forward.14} parent=0 // pred_region
    _
  $region17: #{mvgrl_forward.14} parent=0 // pred_fallthru
    _
  %p21 = scmp.eq.s32.totalorder 0, 0
  // Predicated region
  $region18: #{mvgrl_forward.14} parent=0 // pred_check
    %p22 = pneg %p21
  $region19: #{mvgrl_forward.14} parent=0 // pred_check_branch
    %24 = sbr.rel (%p22) target = $region21
  $region20: #{mvgrl_forward.14} parent=0 // pred_region
    %25 = vst [vmem:[#allocation2] sm:$0xff] 0.0
    %26 = vst [vmem:[#allocation2 + $0x8] sm:$0xff] 0.0
  $region21: #{mvgrl_forward.14} parent=0 // pred_fallthru
    _
  %s27 = smul.u32 0, 8
  %s28 = sshra.s32 %s27, 3
  %s29 = sand.u32 %s27, 7
  %s30 = smul.u32 %s28, 2
  %s31 = smul.addr %s30, 4
  %s32 = scalar_lea.vmem %s1, %s31
  %v33 = vld [vmem:[%s32] sm:$0xff]
  %v34 = vld [vmem:[#allocation2] sm:$0xff]
  %v35 = vld [vmem:[#allocation2 + $0x8] sm:$0xff]
  %v36 = vld [vmem:[%s0] sm:$0xf]
  %v38 = vunpack.c.l.b16 %v33
  %v39 = vunpack.c.h.b16 %v33
  %v40 = vpack.c.b16 %v38, %v38
  %v41 = vpack.c.b16 %v39, %v39
  %vm42 = vcmask 64512
  %v44 = vsel %vm42, %v36, 0
  %vm46 = vcmask 1043456
  %v48 = vsel %vm46, %v40, 0
  %v51 = vsel %vm46, %v41, 0
  %53 = vmatpush.bf16.msra.mxu0 0
  %54 = vmatpush.bf16.msra.mxu0 0
  %55 = vmatpush.bf16.msra.mxu0 0
  %56 = vmatpush.bf16.msra.mxu0 0
  %57 = vmatpush.bf16.msra.mxu0 0
  %58 = vmatpush.bf16.msra.mxu0 0
  %59 = vmatpush.bf16.msra.mxu0 0
  %60 = vmatpush.bf16.msra.mxu0 %v48
  %61 = vmatmul.bf16.gmra.mxu0 %v44
  %v62 = vpop.f32.mrf.mxu0
  %v63 = vadd.f32 0.0, %v62
  %v64 = vpop.f32.mrf.mxu0
  %65 = vdwg.mxu0
  %66 = vmatpush.bf16.msra.mxu0 0
  %67 = vmatpush.bf16.msra.mxu0 0
  %68 = vmatpush.bf16.msra.mxu0 0
  %69 = vmatpush.bf16.msra.mxu0 0
  %70 = vmatpush.bf16.msra.mxu0 0
  %71 = vmatpush.bf16.msra.mxu0 0
  %72 = vmatpush.bf16.msra.mxu0 0
  %73 = vmatpush.bf16.msra.mxu0 %v51
  %74 = vmatmul.bf16.gmra.mxu0 %v44
  %v75 = vpop.f32.mrf.mxu0
  %v76 = vadd.f32 0.0, %v75
  %v77 = vpop.f32.mrf.mxu0
  %78 = vdwg.mxu0
  %v79 = vadd.f32 %v34, %v63
  %v80 = vadd.f32 %v35, %v76
  %81 = vst [vmem:[#allocation2] sm:$0xff] %v79
  %82 = vst [vmem:[#allocation2 + $0x8] sm:$0xff] %v80
  // Predicated region
  $region22: #{mvgrl_forward.14} parent=0 // pred_check
    %p83 = pneg %p21
  $region23: #{mvgrl_forward.14} parent=0 // pred_check_branch
    %85 = sbr.rel (%p83) target = $region25
  $region24: #{mvgrl_forward.14} parent=0 // pred_region
    %v86 = vld [vmem:[#allocation2] sm:$0xff]
    %v87 = vld [vmem:[#allocation2 + $0x8] sm:$0xff]
    %v88 = vld [vmem:[%s2] sm:$0x3]
    %v90 = vperm.slane %v88, 0
    %v91 = vperm.slane %v88, 1
    %v94 = vadd.f32 %v86, %v90
    %v95 = vadd.f32 %v87, %v91
    %s96 = sld [smem:[#allocation3]]
    %vm97 = vcmp.gt.f32.partialorder %v94, 0.0
    %vm98 = vcmp.gt.f32.partialorder %v95, 0.0
    %v99 = vstv %s96
    %v100 = vmul.f32 %v94, %v99
    %v101 = vmul.f32 %v95, %v99
    %v102 = vsel %vm97, %v94, %v100
    %v103 = vsel %vm98, %v95, %v101
    %v104 = vpack.c.bf16 %v103, %v102
    %105 = vst [vmem:[%s4] sm:$0xff] %v104
    %v106 = vrot.slane %v102, 4
    %v107 = vadd.f32 %v102, %v106
    %v108 = vrot.slane %v107, 2
    %v109 = vadd.f32 %v107, %v108
    %v110 = vrot.slane %v109, 1
    %v111 = vadd.f32 %v109, %v110
    %v112 = vrot.slane %v103, 4
    %v113 = vadd.f32 %v103, %v112
    %v114 = vrot.slane %v113, 2
    %v115 = vadd.f32 %v113, %v114
    %v116 = vrot.slane %v115, 1
    %v117 = vadd.f32 %v115, %v116
    %118 = vst [vmem:[%s5] sm:$0xff] %v111
    %119 = vst [vmem:[%s5 + $0x8] sm:$0xff] %v117
  $region25: #{mvgrl_forward.14} parent=0 // pred_fallthru
    _
  // Predicated region
  $region26: #{mvgrl_forward.14} parent=0 // pred_check
    _
  $region27: #{mvgrl_forward.14} parent=0 // pred_check_branch
    %121 = sbr.rel (0) target = $region29
  $region28: #{mvgrl_forward.14} parent=0 // pred_region
    _
  $region29: #{mvgrl_forward.14} parent=0 // pred_fallthru
    _
  // Predicated region
  $region30: #{mvgrl_forward.14} parent=0 // pred_check
    _
  $region31: #{mvgrl_forward.14} parent=0 // pred_check_branch
    %123 = sbr.rel (0) target = $region33
  $region32: #{mvgrl_forward.14} parent=0 // pred_region
    _
  $region33: #{mvgrl_forward.14} parent=0 // pred_fallthru
    _
  // Predicated region
  $region34: #{mvgrl_forward.14} parent=0 // pred_check
    _
  $region35: #{mvgrl_forward.14} parent=0 // pred_check_branch
    %125 = sbr.rel (0) target = $region37
  $region36: #{mvgrl_forward.14} parent=0 // pred_region
    _
  $region37: #{mvgrl_forward.14} parent=0 // pred_fallthru
    _
  // Predicated region
  $region38: #{mvgrl_forward.14} parent=0 // pred_check
    _
  $region39: #{mvgrl_forward.14} parent=0 // pred_check_branch
    %127 = sbr.rel (0) target = $region41
  $region40: #{mvgrl_forward.14} parent=0 // pred_region
    _
  $region41: #{mvgrl_forward.14} parent=0 // pred_fallthru
    _

// kernel: mvgrl_forward.15
$region0: #{mvgrl_forward.15}
  #allocation0 [shape = 'u32[]', space=smem, size = 0x4, offset = 0x4, fixed_abs, tag = 'smem constant byte address 0x4 - core index']
  #allocation1 [shape = 'u32[72,128]{1,0:T(1,128)}', space=vmem, size = 0x9000, scoped, tag = 'internal scratch']
  %s0 = inlined_call_operand.vmem [shape: bf16[16,128], index: 0, kind: input, shape index: {}]
  %s1 = inlined_call_operand.vmem [shape: bf16[128,128], index: 1, kind: input, shape index: {}]
  %s2 = inlined_call_operand.vmem [shape: bf16[16,128], index: 2, kind: output, shape index: {}]
  %s3 = sld [smem:[#allocation0]]
  $region18: #{mvgrl_forward.15} parent=0
    _
  %s5 = ssub.s32 1, %s3
  %s6 = scalar_select 0, %s5, %s3
  // Predicated region
  $region2: #{mvgrl_forward.15} parent=0 // pred_check
    _
  $region3: #{mvgrl_forward.15} parent=0 // pred_check_branch
    %8 = sbr.rel (0) target = $region5
  $region4: #{mvgrl_forward.15} parent=0 // pred_region
    _
  $region5: #{mvgrl_forward.15} parent=0 // pred_fallthru
    _
  // Predicated region
  $region6: #{mvgrl_forward.15} parent=0 // pred_check
    _
  $region7: #{mvgrl_forward.15} parent=0 // pred_check_branch
    %10 = sbr.rel (0) target = $region9
  $region8: #{mvgrl_forward.15} parent=0 // pred_region
    _
  $region9: #{mvgrl_forward.15} parent=0 // pred_fallthru
    _
  %v11 = vld [vmem:[%s0] sm:$0xf]
  %v12 = vld [vmem:[%s0 + $0x4] sm:$0xf]
  %v13 = vld [vmem:[%s1] sm:$0xf]
  %v14 = vld [vmem:[%s1 + $0x4] sm:$0xf]
  %v15 = vld [vmem:[%s1 + $0x8] sm:$0xf]
  %v16 = vld [vmem:[%s1 + $0xc] sm:$0xf]
  %v17 = vld [vmem:[%s1 + $0x10] sm:$0xf]
  %v18 = vld [vmem:[%s1 + $0x14] sm:$0xf]
  %v19 = vld [vmem:[%s1 + $0x18] sm:$0xf]
  %v20 = vld [vmem:[%s1 + $0x1c] sm:$0xf]
  %v21 = vld [vmem:[%s1 + $0x20] sm:$0xf]
  %v22 = vld [vmem:[%s1 + $0x24] sm:$0xf]
  %v23 = vld [vmem:[%s1 + $0x28] sm:$0xf]
  %v24 = vld [vmem:[%s1 + $0x2c] sm:$0xf]
  %v25 = vld [vmem:[%s1 + $0x30] sm:$0xf]
  %v26 = vld [vmem:[%s1 + $0x34] sm:$0xf]
  %v27 = vld [vmem:[%s1 + $0x38] sm:$0xf]
  %v28 = vld [vmem:[%s1 + $0x3c] sm:$0xf]
  %v31 = vunpack.c.l.b16 %v11
  %v32 = vunpack.c.l.b16 %v12
  %v33 = vpack.c.b16 %v32, %v31
  %v51 = vunpack.c.l.b16 %v13
  %v52 = vunpack.c.l.b16 %v14
  %v53 = vunpack.c.l.b16 %v15
  %v54 = vunpack.c.l.b16 %v16
  %v55 = vunpack.c.l.b16 %v17
  %v56 = vunpack.c.l.b16 %v18
  %v57 = vunpack.c.l.b16 %v19
  %v58 = vunpack.c.l.b16 %v20
  %v59 = vunpack.c.l.b16 %v21
  %v60 = vunpack.c.l.b16 %v22
  %v61 = vunpack.c.l.b16 %v23
  %v62 = vunpack.c.l.b16 %v24
  %v63 = vunpack.c.l.b16 %v25
  %v64 = vunpack.c.l.b16 %v26
  %v65 = vunpack.c.l.b16 %v27
  %v66 = vunpack.c.l.b16 %v28
  %v67 = vpack.c.b16 %v52, %v51
  %v68 = vpack.c.b16 %v54, %v53
  %v69 = vpack.c.b16 %v56, %v55
  %v70 = vpack.c.b16 %v58, %v57
  %v71 = vpack.c.b16 %v60, %v59
  %v72 = vpack.c.b16 %v62, %v61
  %v73 = vpack.c.b16 %v64, %v63
  %v74 = vpack.c.b16 %v66, %v65
  %83 = vmatpush.bf16.msra.mxu0 %v74
  %84 = vmatpush.bf16.msra.mxu0 %v73
  %85 = vmatpush.bf16.msra.mxu0 %v72
  %86 = vmatpush.bf16.msra.mxu0 %v71
  %87 = vmatpush.bf16.msra.mxu0 %v70
  %88 = vmatpush.bf16.msra.mxu0 %v69
  %89 = vmatpush.bf16.msra.mxu0 %v68
  %90 = vmatpush.bf16.msra.mxu0 %v67
  %91 = vmatmul.bf16.gmra.mxu0 %v33
  %v92 = vpop.f32.mrf.mxu0
  %v93 = vadd.f32 0.0, %v92
  %v94 = vpop.f32.mrf.mxu0
  %v95 = vadd.f32 0.0, %v94
  %96 = vdwg.mxu0
  %v97 = vpack.c.bf16 %v93, %v93
  %v98 = vpack.c.bf16 %v95, %v95
  %99 = vst [vmem:[%s2] sm:$0xf] %v97
  %100 = vst [vmem:[%s2 + $0x4] sm:$0xf] %v98
  // Predicated region
  $region10: #{mvgrl_forward.15} parent=0 // pred_check
    _
  $region11: #{mvgrl_forward.15} parent=0 // pred_check_branch
    %102 = sbr.rel (0) target = $region13
  $region12: #{mvgrl_forward.15} parent=0 // pred_region
    _
  $region13: #{mvgrl_forward.15} parent=0 // pred_fallthru
    _
  // Predicated region
  $region14: #{mvgrl_forward.15} parent=0 // pred_check
    _
  $region15: #{mvgrl_forward.15} parent=0 // pred_check_branch
    %104 = sbr.rel (0) target = $region17
  $region16: #{mvgrl_forward.15} parent=0 // pred_region
    _
  $region17: #{mvgrl_forward.15} parent=0 // pred_fallthru
    _

// kernel: mvgrl_forward.17
$region0: #{mvgrl_forward.17}
  #allocation0 [shape = 'u32[]', space=smem, size = 0x4, offset = 0x4, fixed_abs, tag = 'smem constant byte address 0x4 - core index']
  #allocation1 [shape = 'u32[72,128]{1,0:T(1,128)}', space=vmem, size = 0x9000, scoped, tag = 'internal scratch']
  #allocation2 [shape = 'f32[1]{0:T(128)S(6)}', space=smem, size = 0x200, scoped, tag = 'scoped memory for mvgrl_forward.17']
  %s0 = inlined_call_operand.vmem [shape: bf16[8,256], index: 0, kind: input, shape index: {}]
  %s1 = inlined_call_operand.vmem [shape: bf16[8,256], index: 1, kind: input, shape index: {}]
  %s2 = inlined_call_operand.vmem [shape: bf16[2,128], index: 2, kind: input, shape index: {}]
  %s3 = inlined_call_operand.<no memory space> [shape: f32[1], index: 3, kind: input, shape index: {}]
  %s4 = inlined_call_operand.vmem [shape: f32[4,8], index: 4, kind: output, shape index: {}]
  %s5 = sld [smem:[#allocation0]]
  $region26: #{mvgrl_forward.17} parent=0
    _
  %s7 = ssub.s32 1, %s5
  %s8 = scalar_select 0, %s7, %s5
  %9 = sst [smem:[#allocation2]] %s3
  // Predicated region
  $region2: #{mvgrl_forward.17} parent=0 // pred_check
    _
  $region3: #{mvgrl_forward.17} parent=0 // pred_check_branch
    %11 = sbr.rel (0) target = $region5
  $region4: #{mvgrl_forward.17} parent=0 // pred_region
    _
  $region5: #{mvgrl_forward.17} parent=0 // pred_fallthru
    _
  // Predicated region
  $region6: #{mvgrl_forward.17} parent=0 // pred_check
    _
  $region7: #{mvgrl_forward.17} parent=0 // pred_check_branch
    %13 = sbr.rel (0) target = $region9
  $region8: #{mvgrl_forward.17} parent=0 // pred_region
    _
  $region9: #{mvgrl_forward.17} parent=0 // pred_fallthru
    _
  // Predicated region
  $region10: #{mvgrl_forward.17} parent=0 // pred_check
    _
  $region11: #{mvgrl_forward.17} parent=0 // pred_check_branch
    %15 = sbr.rel (0) target = $region13
  $region12: #{mvgrl_forward.17} parent=0 // pred_region
    _
  $region13: #{mvgrl_forward.17} parent=0 // pred_fallthru
    _
  // Predicated region
  $region14: #{mvgrl_forward.17} parent=0 // pred_check
    _
  $region15: #{mvgrl_forward.17} parent=0 // pred_check_branch
    %17 = sbr.rel (0) target = $region17
  $region16: #{mvgrl_forward.17} parent=0 // pred_region
    _
  $region17: #{mvgrl_forward.17} parent=0 // pred_fallthru
    _
  %v19 = vld [vmem:[%s2] sm:$0x1]
  %v20 = vld [vmem:[%s0] sm:$0xf]
  %21 = vmatpush.bf16.xpose.msra.mxu0 0
  %22 = vmatpush.bf16.xpose.msra.mxu0 0
  %23 = vmatpush.bf16.xpose.msra.mxu0 0
  %24 = vmatpush.bf16.xpose.msra.mxu0 0
  %25 = vmatpush.bf16.xpose.msra.mxu0 0
  %26 = vmatpush.bf16.xpose.msra.mxu0 0
  %27 = vmatpush.bf16.xpose.msra.mxu0 0
  %28 = vmatpush.bf16.xpose.msra.mxu0 %v20
  %29 = vmatmul.bf16.gmra.mxu0 %v19
  %v30 = vpop.f32.mrf.mxu0
  %v31 = vadd.f32 0.0, %v30
  %v32 = vpop.f32.mrf.mxu0
  %33 = vdwg.mxu0
  %v34 = vld [vmem:[%s1] sm:$0xf]
  %36 = vst [vmem:[#allocation1] ss:$9 sm:$0xff] %v19
  %v37 = vld [vmem:[#allocation1] sm:$0xff]
  %v38 = vshrl.u32 %v37, 16
  %41 = vmatpush.bf16.xpose.msra.mxu0 0
  %42 = vmatpush.bf16.xpose.msra.mxu0 0
  %43 = vmatpush.bf16.xpose.msra.mxu0 0
  %44 = vmatpush.bf16.xpose.msra.mxu0 0
  %45 = vmatpush.bf16.xpose.msra.mxu0 0
  %46 = vmatpush.bf16.xpose.msra.mxu0 0
  %47 = vmatpush.bf16.xpose.msra.mxu0 0
  %48 = vmatpush.bf16.xpose.msra.mxu0 %v34
  %49 = vmatmul.bf16.gmra.mxu0 %v38
  %v50 = vpop.f32.mrf.mxu0
  %v51 = vadd.f32 0.0, %v50
  %v52 = vpop.f32.mrf.mxu0
  %53 = vdwg.mxu0
  %v54 = vld [vmem:[%s0 + $0x4] sm:$0xf]
  %55 = vmatpush.bf16.xpose.msra.mxu0 0
  %56 = vmatpush.bf16.xpose.msra.mxu0 0
  %57 = vmatpush.bf16.xpose.msra.mxu0 0
  %58 = vmatpush.bf16.xpose.msra.mxu0 0
  %59 = vmatpush.bf16.xpose.msra.mxu0 0
  %60 = vmatpush.bf16.xpose.msra.mxu0 0
  %61 = vmatpush.bf16.xpose.msra.mxu0 0
  %62 = vmatpush.bf16.xpose.msra.mxu0 %v54
  %63 = vmatmul.bf16.gmra.mxu0 %v19
  %v64 = vpop.f32.mrf.mxu0
  %v65 = vadd.f32 0.0, %v64
  %v66 = vpop.f32.mrf.mxu0
  %67 = vdwg.mxu0
  %v68 = vld [vmem:[%s1 + $0x4] sm:$0xf]
  %69 = vst [vmem:[#allocation1] ss:$9 sm:$0xff] %v19
  %v70 = vld [vmem:[#allocation1] sm:$0xff]
  %v71 = vshrl.u32 %v70, 16
  %74 = vmatpush.bf16.xpose.msra.mxu0 0
  %75 = vmatpush.bf16.xpose.msra.mxu0 0
  %76 = vmatpush.bf16.xpose.msra.mxu0 0
  %77 = vmatpush.bf16.xpose.msra.mxu0 0
  %78 = vmatpush.bf16.xpose.msra.mxu0 0
  %79 = vmatpush.bf16.xpose.msra.mxu0 0
  %80 = vmatpush.bf16.xpose.msra.mxu0 0
  %81 = vmatpush.bf16.xpose.msra.mxu0 %v68
  %82 = vmatmul.bf16.gmra.mxu0 %v71
  %v83 = vpop.f32.mrf.mxu0
  %v84 = vadd.f32 0.0, %v83
  %v85 = vpop.f32.mrf.mxu0
  %86 = vdwg.mxu0
  %v88 = vrot.slane %v51, 7
  %v91 = vrot.slane %v65, 6
  %v94 = vrot.slane %v84, 5
  %vm96 = vcmask 1040384
  %v97 = vsel %vm96, %v31, %v88
  %vm98 = vcmask 1041408
  %v99 = vsel %vm98, %v97, %v91
  %vm100 = vcmask 1042432
  %v101 = vsel %vm100, %v99, %v94
  %s102 = sld [smem:[#allocation2]]
  %v103 = vstv %s102
  %v104 = vadd.f32 %v101, %v103
  %vm105 = vcmask 60416
  %106 = vst.msk [vmem:[%s4] sm:$0xf] %vm105, %v104
  // Predicated region
  $region18: #{mvgrl_forward.17} parent=0 // pred_check
    _
  $region19: #{mvgrl_forward.17} parent=0 // pred_check_branch
    %108 = sbr.rel (0) target = $region21
  $region20: #{mvgrl_forward.17} parent=0 // pred_region
    _
  $region21: #{mvgrl_forward.17} parent=0 // pred_fallthru
    _
  // Predicated region
  $region22: #{mvgrl_forward.17} parent=0 // pred_check
    _
  $region23: #{mvgrl_forward.17} parent=0 // pred_check_branch
    %110 = sbr.rel (0) target = $region25
  $region24: #{mvgrl_forward.17} parent=0 // pred_region
    _
  $region25: #{mvgrl_forward.17} parent=0 // pred_fallthru
    _

</llo_original>
